<compile_context>
chip_gen: v6e
topology: v6e:2x2x1
jax: 0.10.0
libtpu: 0.0.40
codegen_flags: <defaults>
</compile_context>

<pallas_src>
import functools
import math

import jax
import jax.numpy as jnp
from jax.experimental import pallas as pl
from jax.experimental.pallas import tpu as pltpu


def _rmsnorm_kernel(x_ref, w_ref, o_ref, *, eps):
    # x_ref: (tile_rows, dim) block; w_ref: (1, dim) broadcast weight.
    x = x_ref[...]
    xf = x.astype(jnp.float32)                        # x.float()
    ms = jnp.mean(xf * xf, axis=-1, keepdims=True)    # mean of squares over dim
    inv = jax.lax.rsqrt(ms + eps)                     # rsqrt(ms + eps)
    normed = xf * inv
    if x.dtype != jnp.float32:
        # .type_as(x): round down to the activation dtype before the weight
        # multiply (matches PyTorch bit-for-bit for bf16/fp16 inputs).
        normed = normed.astype(x.dtype)
    # weight * normed promotes like torch (e.g. f32 weight * bf16 normed -> f32)
    o_ref[...] = (w_ref[...] * normed).astype(o_ref.dtype)


def _default_vmem_limit_bytes() -> int:
    """Chip-aware VMEM budget: ~60% of physical VMEM, capped at 96 MiB.

    v5e/v6e (128 MiB physical) -> ~76 MiB; v7x (64 MiB physical) -> ~38 MiB.
    Falls back to a conservative 48 MiB if the query is unavailable.
    """
    try:
        cap = int(pltpu.get_tpu_info().vmem_capacity_bytes)
        return min(int(cap * 0.6), 96 * 1024 * 1024)
    except Exception:
        return 48 * 1024 * 1024


def _pick_tile_rows(rows: int, dim: int, in_bytes: int, out_bytes: int,
                    vmem_limit_bytes: int) -> int:
    """Largest row tile whose buffers fit VMEM, capped by a bytes/block target."""
    # Per row of the tile:
    #  * 2x double-buffered input block   : 2 * dim * in_bytes
    #  * 2x double-buffered output block  : 2 * dim * out_bytes
    #  * f32 compute intermediates        : upcast xf (+ pre-downcast normed for
    #    sub-32-bit inputs) materialized by Mosaic.
    n_f32_temps = 2 if in_bytes < 4 else 1
    per_row = 2 * dim * (in_bytes + out_bytes) + n_f32_temps * dim * 4
    budget = int(vmem_limit_bytes * 0.75)             # headroom: weight, scratch
    tile_vmem = max(1, budget // max(per_row, 1))

    # Bytes-per-block target: ~8 MiB of input per grid step keeps every shape
    # in the >=85%-of-roofline regime (vs. a fixed row cap that left small-dim
    # shapes step-overhead-bound).
    target_in_block_bytes = 8 * 1024 * 1024
    tile_target = max(1, target_in_block_bytes // max(dim * in_bytes, 1))

    tile = min(tile_vmem, tile_target)
    # Round down to the native sublane packing (8 for f32, 16 for bf16, ...);
    # required so a non-full block satisfies the (8,128) tiling constraint.
    packing = 8 * max(1, 4 // in_bytes)
    tile = max(packing, (tile // packing) * packing)
    return tile


def rmsnorm(x: jax.Array, weight: jax.Array, eps: float = 1e-6,
            tile_rows: int | None = None,
            vmem_limit_bytes: int | None = None,
            output_dtype=None) -> jax.Array:
    """RMSNorm over the last axis of x, scaled by `weight` (shape (dim,)).

    `output_dtype=None` follows torch promotion (weight * normed); pass e.g.
    jnp.bfloat16 for a lower-HBM-traffic fast path when that's acceptable.
    """
    orig_shape = x.shape
    dim = orig_shape[-1]
    rows = math.prod(orig_shape[:-1]) if len(orig_shape) > 1 else 1
    x2d = x.reshape(rows, dim)
    w2d = weight.reshape(1, dim)

    # PyTorch parity: output dtype follows torch promotion (weight * normed),
    # unless the caller explicitly opts into a narrower output.
    out_dtype = (jnp.promote_types(x.dtype, weight.dtype)
                 if output_dtype is None else jnp.dtype(output_dtype))

    if vmem_limit_bytes is None:
        vmem_limit_bytes = _default_vmem_limit_bytes()

    if tile_rows is None:
        tile_rows = _pick_tile_rows(
            rows, dim,
            in_bytes=jnp.dtype(x.dtype).itemsize,
            out_bytes=jnp.dtype(out_dtype).itemsize,
            vmem_limit_bytes=vmem_limit_bytes)
    if tile_rows >= rows:
        tile_rows = rows                              # single full-extent block

    # Ragged row counts: masked last block (row padding is harmless since the
    # reduction is over the full, untiled last dim).
    grid = (pl.cdiv(rows, tile_rows),)

    # TODO(synk): for dim not a multiple of 128 (masked-lane stores) consider
    # packing/padding the lane dim in the wrapper; production LLaMA dims are
    # multiples of 128 so the kernel keeps the simple layout here.
    # TODO(synk): on v7x, verify with xprof that the row axis shards across
    # both TensorCores; switch to pltpu.CORE_PARALLEL if one TC sits idle.
    out2d = pl.pallas_call(
        functools.partial(_rmsnorm_kernel, eps=eps),
        out_shape=jax.ShapeDtypeStruct((rows, dim), out_dtype),
        grid_spec=pltpu.PrefetchScalarGridSpec(
            num_scalar_prefetch=0,
            grid=grid,
            in_specs=[
                pl.BlockSpec((tile_rows, dim), lambda i: (i, 0)),
                pl.BlockSpec((1, dim), lambda i: (0, 0)),
            ],
            out_specs=pl.BlockSpec((tile_rows, dim), lambda i: (i, 0)),
        ),
        compiler_params=pltpu.CompilerParams(
            dimension_semantics=("parallel",),
            vmem_limit_bytes=vmem_limit_bytes),
    )(x2d, w2d)

    return out2d.reshape(orig_shape[:-1] + (dim,))


def _reference(x, weight, eps):
    xf = x.astype(jnp.float32)
    normed = xf * jax.lax.rsqrt(jnp.mean(xf * xf, axis=-1, keepdims=True) + eps)
    return weight * normed.astype(x.dtype)


if __name__ == "__main__":
    key = jax.random.PRNGKey(0)
    eps = 1e-6

    # Small shape consistent with the module: (batch=2, seq=8, dim=32).
    batch, seq, dim = 2, 8, 32
    x = jax.random.normal(key, (batch, seq, dim), dtype=jnp.float32)
    weight = jnp.ones((dim,), dtype=jnp.float32)   # nn.Parameter(torch.ones(dim))

    out = rmsnorm(x, weight, eps)
    out = jax.block_until_ready(out)
    ref = _reference(x, weight, eps)
    assert out.shape == x.shape
    assert jnp.allclose(out, ref, atol=1e-5, rtol=1e-5)

    # Ragged (rows % tile_rows != 0) masked-last-block path.
    x_rag = jax.random.normal(jax.random.PRNGKey(0), (20, dim), dtype=jnp.float32)
    out_rag = jax.block_until_ready(rmsnorm(x_rag, weight, eps, tile_rows=8))
    ref_rag = _reference(x_rag, weight, eps)
    assert out_rag.shape == x_rag.shape
    assert jnp.allclose(out_rag, ref_rag, atol=1e-5, rtol=1e-5)

    # bf16 activations with f32 weight (torch promotion -> f32 output),
    # exercising the type_as downcast-before-weight path.
    x_bf16 = x.astype(jnp.bfloat16)
    out_bf16 = jax.block_until_ready(rmsnorm(x_bf16, weight, eps))
    ref_bf16 = _reference(x_bf16, weight, eps)
    assert out_bf16.dtype == jnp.float32
    assert jnp.allclose(out_bf16, ref_bf16, atol=1e-2, rtol=1e-2)

    print("KERNEL_OK")
</pallas_src>

<mosaic_0001>
module attributes {stable_mosaic.version = 11 : i64} {
  func.func @_rmsnorm_kernel(%arg0: i32, %arg1: memref<16x32xf32, #tpu.memory_space<vmem>>, %arg2: memref<1x32xf32, #tpu.memory_space<vmem>>, %arg3: memref<16x32xf32, #tpu.memory_space<vmem>>) attributes {dimension_semantics = [#tpu.dimension_semantics<parallel>], iteration_bounds = array<i64: 1>, scalar_prefetch = 0 : i64, scratch_operands = 0 : i64, tpu.core_type = #tpu.core_type<tc>, window_params = [{transform_indices = @transform_0, window_bounds = array<i64: 16, 32>}, {pipeline_mode = #tpu.pipeline_mode<synchronous>, transform_indices = @transform_1, window_bounds = array<i64: 1, 32>}, {transform_indices = @transform_2, window_bounds = array<i64: 16, 32>}]} {
    %c0 = arith.constant 0 : index
    %c0_0 = arith.constant 0 : index
    %0 = vector.load %arg1[%c0, %c0_0] : memref<16x32xf32, #tpu.memory_space<vmem>>, vector<16x32xf32>
    %1 = arith.mulf %0, %0 : vector<16x32xf32>
    %cst = arith.constant dense<0.000000e+00> : vector<16xf32>
    %2 = vector.multi_reduction <add>, %1, %cst [1] : vector<16x32xf32> to vector<16xf32>
    %3 = vector.shape_cast %2 : vector<16xf32> to vector<16x1xf32>
    %cst_1 = arith.constant 3.200000e+01 : f32
    %4 = vector.broadcast %cst_1 : f32 to vector<16x1xf32>
    %5 = arith.divf %3, %4 : vector<16x1xf32>
    %cst_2 = arith.constant 9.99999997E-7 : f32
    %6 = vector.broadcast %cst_2 : f32 to vector<16x1xf32>
    %7 = arith.addf %5, %6 : vector<16x1xf32>
    %8 = math.rsqrt %7 : vector<16x1xf32>
    %9 = vector.broadcast %8 : vector<16x1xf32> to vector<16x32xf32>
    %10 = arith.mulf %0, %9 : vector<16x32xf32>
    %c0_3 = arith.constant 0 : index
    %c0_4 = arith.constant 0 : index
    %11 = vector.load %arg2[%c0_3, %c0_4] : memref<1x32xf32, #tpu.memory_space<vmem>>, vector<1x32xf32>
    %12 = vector.broadcast %11 : vector<1x32xf32> to vector<16x32xf32>
    %13 = arith.mulf %12, %10 : vector<16x32xf32>
    %c0_5 = arith.constant 0 : index
    %c0_6 = arith.constant 0 : index
    %14 = vector.load %arg3[%c0_5, %c0_6] : memref<16x32xf32, #tpu.memory_space<vmem>>, vector<16x32xf32>
    tpu.vector_store %arg3[%c0_5, %c0_6], %13 {strides = array<i32>} : memref<16x32xf32, #tpu.memory_space<vmem>>, vector<16x32xf32>,
    return
  }
  func.func @transform_0(%arg0: i32) -> (i32, i32) {
    %c0_i32 = arith.constant 0 : i32
    %c0_i32_0 = arith.constant 0 : i32
    return %arg0, %c0_i32 : i32, i32
  }
  func.func @transform_1(%arg0: i32) -> (i32, i32) {
    %c0_i32 = arith.constant 0 : i32
    %c0_i32_0 = arith.constant 0 : i32
    %c0_i32_1 = arith.constant 0 : i32
    return %c0_i32, %c0_i32_0 : i32, i32
  }
  func.func @transform_2(%arg0: i32) -> (i32, i32) {
    %c0_i32 = arith.constant 0 : i32
    %c0_i32_0 = arith.constant 0 : i32
    return %arg0, %c0_i32 : i32, i32
  }
}

</mosaic_0001>

<llo_original>
// kernel: tpu_custom_call.1
$region0: #{tpu_custom_call.1}
  #allocation0 [shape = 'u32[]', space=smem, size = 0x4, offset = 0x4, fixed_abs, tag = 'smem constant byte address 0x4 - core index']
  #allocation1 [shape = 'u32[144,128]{1,0:T(1,128)}', space=vmem, size = 0x12000, scoped, tag = 'internal scratch']
  %s0 = inlined_call_operand.hbm [shape: f32[16,32], index: 0, kind: input, shape index: {}]
  %s1 = inlined_call_operand.vmem [shape: f32[1,32], index: 1, kind: input, shape index: {}]
  %s2 = inlined_call_operand.hbm [shape: f32[16,32], index: 2, kind: output, shape index: {}]
  %s3 = sld [smem:[#allocation0]]
  $region22: #{tpu_custom_call.1} parent=0
    _
  %s5 = ssub.s32 1, %s3
  %s6 = scalar_select 0, %s5, %s3
  $region1: #{tpu_custom_call.1} parent=0
    #allocation2 [shape = 'u8[8192]{0}', space=vmem, size = 0x2000, scoped, tag = 'input window, operand 0, single buffered']
    #allocation3 [shape = 's32[1]{0}', space=sflag, size = 0x4, scoped, tag = 'scoped memory for tpu_custom_call.1']
    #allocation4 [shape = 's32[1]{0}', space=sflag, size = 0x4, scoped, tag = 'scoped memory for tpu_custom_call.1']
    #allocation5 [shape = 'u8[8192]{0}', space=vmem, size = 0x2000, scoped, tag = 'output window, operand 0, single buffered']
    %7 = vsyncpa [#allocation3], 0
    %8 = vsyncpa [#allocation4], 0
    // Predicated region
    $region2: #{tpu_custom_call.1} parent=1 // pred_check
      _
    $region3: #{tpu_custom_call.1} parent=1 // pred_check_branch
      %10 = sbr.rel (0) target = $region5
    $region4: #{tpu_custom_call.1} parent=1 // pred_region
      %s12 = ssub.s32 256, 256
      %13 = vsyncadd [#allocation3], %s12
      %s14 = sshll.u32 [#allocation2], 4
      %s15 = int_to_ptr.vmem [resolvable:$true] %s14
      %20 = dma.hbm_to_vmem [thread:$0]  %s0, 256, %s15, [#allocation3], 128, 128, 8
    $region5: #{tpu_custom_call.1} parent=1 // pred_fallthru
      _
    // Predicated region
    $region6: #{tpu_custom_call.1} parent=1 // pred_check
      _
    $region7: #{tpu_custom_call.1} parent=1 // pred_check_branch
      %22 = sbr.rel (0) target = $region9
    $region8: #{tpu_custom_call.1} parent=1 // pred_region
      _
    $region9: #{tpu_custom_call.1} parent=1 // pred_fallthru
      _
    // Predicated region
    $region10: #{tpu_custom_call.1} parent=1 // pred_check
      _
    $region11: #{tpu_custom_call.1} parent=1 // pred_check_branch
      %24 = sbr.rel (0) target = $region13
    $region12: #{tpu_custom_call.1} parent=1 // pred_region
      %25 = dma.done [#allocation3], 256
    $region13: #{tpu_custom_call.1} parent=1 // pred_fallthru
      _
    %v26 = vld [vmem:[#allocation2] sm:$0xff]
    %v27 = vld [vmem:[#allocation2 + $0x8] sm:$0xff]
    %v28 = vmul.f32 %v26, %v26
    %v29 = vmul.f32 %v27, %v27
    %vm30 = vcmask 261120
    %v31 = vsel %vm30, %v28, 0.0
    %32 = vadd.xlane.f32.xlu0 %v31
    %v33 = vpop.xlane.xlu0 %32
    %v34 = vsel %vm30, %v29, 0.0
    %35 = vadd.xlane.f32.xlu0 %v34
    %v36 = vpop.xlane.xlu0 %35
    %v37 = vrcp.pop 32.0
    %v38 = vmul.f32 %v33, %v37
    %v39 = vmul.f32 %v36, %v37
    %v40 = vadd.f32 %v38, 1e-06
    %v41 = vadd.f32 %v39, 1e-06
    %v42 = vrsqrt.pop %v40
    %v43 = vrsqrt.pop %v41
    %v44 = vmul.f32 %v26, %v42
    %v45 = vmul.f32 %v27, %v43
    %v46 = vld [vmem:[%s1] sm:$0x1]
    %v48 = vlaneseq
    %v49 = vshrl.u32 %v48, 7
    %v50 = vsub.s32 0, %v49
    %v51 = vrot.slane %v46, %v50
    %v53 = vmul.f32 %v51, %v44
    %v54 = vmul.f32 %v51, %v45
    %55 = vst.msk [vmem:[#allocation5] sm:$0xff] %vm30, %v53
    %56 = vst.msk [vmem:[#allocation5 + $0x8] sm:$0xff] %vm30, %v54
    // Predicated region
    $region14: #{tpu_custom_call.1} parent=1 // pred_check
      _
    $region15: #{tpu_custom_call.1} parent=1 // pred_check_branch
      %58 = sbr.rel (0) target = $region17
    $region16: #{tpu_custom_call.1} parent=1 // pred_region
      %s60 = ssub.s32 256, 256
      %61 = vsyncadd [#allocation4], %s60
      %s62 = sshll.u32 [#allocation5], 4
      %s63 = int_to_ptr.vmem [resolvable:$true] %s62
      %68 = dma.vmem_to_hbm [thread:$0]  %s63, 256, %s2, [#allocation4], 128, 128, 8
    $region17: #{tpu_custom_call.1} parent=1 // pred_fallthru
      _
    // Predicated region
    $region18: #{tpu_custom_call.1} parent=1 // pred_check
      _
    $region19: #{tpu_custom_call.1} parent=1 // pred_check_branch
      %70 = sbr.rel (0) target = $region21
    $region20: #{tpu_custom_call.1} parent=1 // pred_region
      %71 = dma.done [#allocation4], 256
    $region21: #{tpu_custom_call.1} parent=1 // pred_fallthru
      _
    %72 = vsyncpa [#allocation3], 1
    %73 = vsyncpa [#allocation4], 1

</llo_original>
